<compile_context>
chip_gen: v7x
topology: tpu7x:2x2x1
jax: 0.10.0
libtpu: 0.0.40
codegen_flags: <defaults>
</compile_context>

<pallas_src>
import functools

import jax
import jax.numpy as jnp
from jax.experimental import pallas as pl
from jax.experimental.pallas import tpu as pltpu

_LANES = 128


def _kl_reference(z_mean, z_log_sigma, z_sigma):
    batch_size = z_mean.shape[0]
    z_mean_sq = z_mean * z_mean
    z_sigma_sq = z_sigma * z_sigma
    z_log_sigma_sq = 2.0 * z_log_sigma
    return 0.5 * jnp.sum(z_mean_sq + z_sigma_sq - z_log_sigma_sq - 1.0) / batch_size


def _default_tile_rows():
    try:
        info = pltpu.get_tpu_info()
        vmem = int(info.vmem_capacity_bytes)
    except Exception:  # pragma: no cover - conservative fallback
        return 4096
    # 128 MiB VMEM chips (v5e/v6e) can afford bigger blocks; v7x (64 MiB) can't.
    return 8192 if vmem >= (100 << 20) else 4096


def _kl_kernel(m_ref, ls_ref, s_ref, out_ref, *, rows, tr, lanes, fold, needs_mask):
    c = pl.program_id(0)          # core-split axis ("parallel")
    i = pl.program_id(1)          # reduction axis ("arbitrary")
    spc = pl.num_programs(1)

    @pl.when(i == 0)
    def _init():
        out_ref[...] = jnp.zeros_like(out_ref)

    # Upcast in-register; inputs stay narrow in HBM.
    m = m_ref[...].astype(jnp.float32)
    ls = ls_ref[...].astype(jnp.float32)
    s = s_ref[...].astype(jnp.float32)

    # "-1" is hoisted: subtracted once (n_real) in the wrapper epilogue, so
    # masked-out / out-of-range elements contribute exactly 0 here.
    contrib = m * m + s * s - 2.0 * ls

    if needs_mask:
        row0 = (c * spc + i) * tr
        row_ids = jax.lax.broadcasted_iota(jnp.int32, (tr, lanes), 0) + row0
        contrib = jnp.where(row_ids < rows, contrib, 0.0)

    if fold:
        # Fold sublane groups into a fixed small accumulator (same VALU adds,
        # far less acc VMEM traffic, tiny epilogue reduce).
        out_ref[...] += contrib.reshape(-1, 8, lanes).sum(axis=0)
    else:
        out_ref[...] += contrib


def kl_criterion(z_mean, z_log_sigma, z_sigma, *, tile_rows=None, use_pallas=None):
    """Pallas implementation of KLCriterion.forward. Returns a scalar f32."""
    assert z_mean.shape == z_log_sigma.shape == z_sigma.shape
    batch_size = int(z_mean.shape[0])

    n_real = 1
    for d in z_mean.shape:
        n_real *= int(d)

    if use_pallas is None:
        # Tiny inputs are pure launch/DMA overhead for any kernel.
        use_pallas = n_real >= (1 << 18)
    if not use_pallas:
        return _kl_reference(
            z_mean.astype(jnp.float32),
            z_log_sigma.astype(jnp.float32),
            z_sigma.astype(jnp.float32),
        )

    # --- Layout: free (row-major) reshape only, no pad, no astype. ---
    if n_real % _LANES == 0:
        lanes = _LANES                       # lane-dense slab
    else:
        lanes = int(z_mean.shape[-1])        # natural last dim (full-dim block)
    rows = n_real // lanes

    inputs = (z_mean, z_log_sigma, z_sigma)
    m2, ls2, s2 = (x.reshape(rows, lanes) for x in inputs)

    # --- Tile-row selection. ---
    if tile_rows is None:
        tile_rows = _default_tile_rows()
    if int(tile_rows) >= rows:
        tr = rows                            # single tile: full dim is allowed
    else:
        sub = 8
        if any(x.dtype.itemsize < 4 for x in inputs):
            sub = 32                         # keep packed-dtype tiling happy
        tr = max(sub, (int(tile_rows) // sub) * sub)
        if tr >= rows:
            tr = rows

    num_tiles = -(-rows // tr)
    num_cores = min(2, num_tiles)            # v7x dual-TC split; no-op elsewhere
    spc = -(-num_tiles // num_cores)         # steps per core
    max_block = num_tiles - 1
    needs_mask = (num_cores * spc * tr) != rows
    fold = (tr % 8 == 0)
    acc_rows = 8 if fold else tr

    kernel = functools.partial(
        _kl_kernel, rows=rows, tr=tr, lanes=lanes, fold=fold, needs_mask=needs_mask
    )

    def in_map(c, i):
        # Clamp fully out-of-range blocks (odd tile splits); the row mask
        # zeroes their contribution.
        return (jnp.minimum(c * spc + i, max_block), 0)

    in_spec = pl.BlockSpec((tr, lanes), in_map)
    out_spec = pl.BlockSpec((None, acc_rows, lanes), lambda c, i: (c, 0, 0))

    in_bytes = sum(int(x.size) * x.dtype.itemsize for x in inputs)
    out_bytes = num_cores * acc_rows * lanes * 4
    buf_bytes = sum(2 * tr * lanes * x.dtype.itemsize for x in inputs)
    vmem_limit = max(32 << 20, buf_bytes + (8 << 20))

    partials = pl.pallas_call(
        kernel,
        grid=(num_cores, spc),
        in_specs=[in_spec, in_spec, in_spec],
        out_specs=out_spec,
        out_shape=jax.ShapeDtypeStruct((num_cores, acc_rows, lanes), jnp.float32),
        compiler_params=pltpu.CompilerParams(
            dimension_semantics=("parallel", "arbitrary"),
            vmem_limit_bytes=int(vmem_limit),
        ),
        cost_estimate=pl.CostEstimate(
            flops=6 * n_real,
            transcendentals=0,
            bytes_accessed=in_bytes + out_bytes,
        ),
    )(m2, ls2, s2)

    total = jnp.sum(partials, dtype=jnp.float32)
    return (total - jnp.float32(n_real)) * jnp.float32(0.5 / batch_size)


if __name__ == "__main__":
    key = jax.random.PRNGKey(0)
    k1, k2, k3, k4, k5, k6 = jax.random.split(key, 6)

    # Small case matching the module's natural usage (batch=2, hidden=32).
    B, D = 2, 32
    z_mean = jax.random.normal(k1, (B, D), dtype=jnp.float32)
    z_log_sigma = 0.1 * jax.random.normal(k2, (B, D), dtype=jnp.float32)
    z_sigma = jnp.exp(z_log_sigma)
    out = jax.block_until_ready(
        kl_criterion(z_mean, z_log_sigma, z_sigma, use_pallas=True)
    )
    ref = _kl_reference(z_mean, z_log_sigma, z_sigma)
    assert jnp.allclose(out, ref, rtol=1e-5, atol=1e-5), (out, ref)

    # Lane-dense multi-tile case: exercises 2-way core split + folded accumulator.
    B2, D2 = 64, 4096
    zm = jax.random.normal(k3, (B2, D2), dtype=jnp.float32)
    zls = 0.1 * jax.random.normal(k4, (B2, D2), dtype=jnp.float32)
    zs = jnp.exp(zls)
    out2 = jax.block_until_ready(
        kl_criterion(zm, zls, zs, tile_rows=512, use_pallas=True)
    )
    ref2 = _kl_reference(zm, zls, zs)
    assert jnp.allclose(out2, ref2, rtol=1e-4, atol=1e-4), (out2, ref2)

    # Ragged case (rows not divisible by tile, uneven core split): exercises the
    # in-kernel row mask and the clamped index_map on duplicated tail blocks.
    B3, D3 = 5, 896
    zm3 = jax.random.normal(k5, (B3, D3), dtype=jnp.float32)
    zls3 = 0.1 * jax.random.normal(k6, (B3, D3), dtype=jnp.float32)
    zs3 = jnp.exp(zls3)
    out3 = jax.block_until_ready(
        kl_criterion(zm3, zls3, zs3, tile_rows=8, use_pallas=True)
    )
    ref3 = _kl_reference(zm3, zls3, zs3)
    assert jnp.allclose(out3, ref3, rtol=1e-4, atol=1e-4), (out3, ref3)

    print("KERNEL_OK")
</pallas_src>

<mosaic_0001>
module attributes {stable_mosaic.version = 11 : i64} {
  func.func @_kl_kernel(%arg0: i32, %arg1: i32, %arg2: memref<2x32xf32, #tpu.memory_space<vmem>>, %arg3: memref<2x32xf32, #tpu.memory_space<vmem>>, %arg4: memref<2x32xf32, #tpu.memory_space<vmem>>, %arg5: memref<1x2x32xf32, #tpu.memory_space<vmem>>) attributes {dimension_semantics = [#tpu.dimension_semantics<parallel>, #tpu.dimension_semantics<arbitrary>], iteration_bounds = array<i64: 1, 1>, scalar_prefetch = 0 : i64, scratch_operands = 0 : i64, tpu.core_type = #tpu.core_type<tc>, window_params = [{transform_indices = @transform_0, window_bounds = array<i64: 2, 32>}, {transform_indices = @transform_1, window_bounds = array<i64: 2, 32>}, {transform_indices = @transform_2, window_bounds = array<i64: 2, 32>}, {transform_indices = @transform_3, window_bounds = array<i64: 1, 2, 32>}]} {
    %c0_i32 = arith.constant 0 : i32
    %0 = arith.cmpi eq, %arg1, %c0_i32 : i32
    %1 = arith.extui %0 : i1 to i32
    %c0_i32_0 = arith.constant 0 : i32
    %2 = arith.cmpi ne, %1, %c0_i32_0 : i32
    scf.if %2 {
      %cst_12 = arith.constant 0.000000e+00 : f32
      %18 = vector.broadcast %cst_12 : f32 to vector<2x32xf32>
      %c0_13 = arith.constant 0 : index
      %c0_14 = arith.constant 0 : index
      %c0_15 = arith.constant 0 : index
      %19 = vector.load %arg5[%c0_13, %c0_14, %c0_15] : memref<1x2x32xf32, #tpu.memory_space<vmem>>, vector<1x2x32xf32>
      %20 = vector.shape_cast %19 : vector<1x2x32xf32> to vector<2x32xf32>
      %21 = vector.shape_cast %18 : vector<2x32xf32> to vector<1x2x32xf32>
      tpu.vector_store %arg5[%c0_13, %c0_14, %c0_15], %21 {strides = array<i32>} : memref<1x2x32xf32, #tpu.memory_space<vmem>>, vector<1x2x32xf32>,
    } else {
    }
    %c0 = arith.constant 0 : index
    %c0_1 = arith.constant 0 : index
    %3 = vector.load %arg2[%c0, %c0_1] : memref<2x32xf32, #tpu.memory_space<vmem>>, vector<2x32xf32>
    %c0_2 = arith.constant 0 : index
    %c0_3 = arith.constant 0 : index
    %4 = vector.load %arg3[%c0_2, %c0_3] : memref<2x32xf32, #tpu.memory_space<vmem>>, vector<2x32xf32>
    %c0_4 = arith.constant 0 : index
    %c0_5 = arith.constant 0 : index
    %5 = vector.load %arg4[%c0_4, %c0_5] : memref<2x32xf32, #tpu.memory_space<vmem>>, vector<2x32xf32>
    %6 = arith.mulf %3, %3 : vector<2x32xf32>
    %7 = arith.mulf %5, %5 : vector<2x32xf32>
    %8 = arith.addf %6, %7 : vector<2x32xf32>
    %cst = arith.constant 2.000000e+00 : f32
    %9 = vector.broadcast %cst : f32 to vector<2x32xf32>
    %10 = arith.mulf %9, %4 : vector<2x32xf32>
    %11 = arith.subf %8, %10 : vector<2x32xf32>
    %c0_6 = arith.constant 0 : index
    %c0_7 = arith.constant 0 : index
    %c0_8 = arith.constant 0 : index
    %12 = vector.load %arg5[%c0_6, %c0_7, %c0_8] : memref<1x2x32xf32, #tpu.memory_space<vmem>>, vector<1x2x32xf32>
    %13 = vector.shape_cast %12 : vector<1x2x32xf32> to vector<2x32xf32>
    %14 = arith.addf %13, %11 : vector<2x32xf32>
    %c0_9 = arith.constant 0 : index
    %c0_10 = arith.constant 0 : index
    %c0_11 = arith.constant 0 : index
    %15 = vector.load %arg5[%c0_9, %c0_10, %c0_11] : memref<1x2x32xf32, #tpu.memory_space<vmem>>, vector<1x2x32xf32>
    %16 = vector.shape_cast %15 : vector<1x2x32xf32> to vector<2x32xf32>
    %17 = vector.shape_cast %14 : vector<2x32xf32> to vector<1x2x32xf32>
    tpu.vector_store %arg5[%c0_9, %c0_10, %c0_11], %17 {strides = array<i32>} : memref<1x2x32xf32, #tpu.memory_space<vmem>>, vector<1x2x32xf32>,
    return
  }
  func.func @transform_0(%arg0: i32, %arg1: i32) -> (i32, i32) {
    %c1_i32 = arith.constant 1 : i32
    %0 = arith.muli %arg0, %c1_i32 : i32
    %1 = arith.addi %0, %arg1 : i32
    %c0_i32 = arith.constant 0 : i32
    %2 = arith.minsi %1, %c0_i32 : i32
    %c0_i32_0 = arith.constant 0 : i32
    %c0_i32_1 = arith.constant 0 : i32
    return %2, %c0_i32_0 : i32, i32
  }
  func.func @transform_1(%arg0: i32, %arg1: i32) -> (i32, i32) {
    %c1_i32 = arith.constant 1 : i32
    %0 = arith.muli %arg0, %c1_i32 : i32
    %1 = arith.addi %0, %arg1 : i32
    %c0_i32 = arith.constant 0 : i32
    %2 = arith.minsi %1, %c0_i32 : i32
    %c0_i32_0 = arith.constant 0 : i32
    %c0_i32_1 = arith.constant 0 : i32
    return %2, %c0_i32_0 : i32, i32
  }
  func.func @transform_2(%arg0: i32, %arg1: i32) -> (i32, i32) {
    %c1_i32 = arith.constant 1 : i32
    %0 = arith.muli %arg0, %c1_i32 : i32
    %1 = arith.addi %0, %arg1 : i32
    %c0_i32 = arith.constant 0 : i32
    %2 = arith.minsi %1, %c0_i32 : i32
    %c0_i32_0 = arith.constant 0 : i32
    %c0_i32_1 = arith.constant 0 : i32
    return %2, %c0_i32_0 : i32, i32
  }
  func.func @transform_3(%arg0: i32, %arg1: i32) -> (i32, i32, i32) {
    %c0_i32 = arith.constant 0 : i32
    %c0_i32_0 = arith.constant 0 : i32
    %c0_i32_1 = arith.constant 0 : i32
    return %arg0, %c0_i32, %c0_i32_0 : i32, i32, i32
  }
}

</mosaic_0001>

<llo_original>
// kernel: tpu_custom_call.1
$region0: #{tpu_custom_call.1}
  #allocation0 [shape = 'u32[]', space=smem, size = 0x4, offset = 0x4, fixed_abs, tag = 'smem constant byte address 0x4 - core index']
  #allocation1 [shape = 'u32[144,128]{1,0:T(1,128)}', space=vmem, size = 0x12000, scoped, tag = 'internal scratch']
  %s0 = inlined_call_operand.hbm [shape: f32[2,32], index: 0, kind: input, shape index: {}]
  %s1 = inlined_call_operand.vmem [shape: f32[2,32], index: 1, kind: input, shape index: {}]
  %s2 = inlined_call_operand.vmem [shape: f32[2,32], index: 2, kind: input, shape index: {}]
  %s3 = inlined_call_operand.hbm [shape: f32[1,2,32], index: 3, kind: output, shape index: {}]
  %s4 = sld [smem:[#allocation0]]
  $region30: #{tpu_custom_call.1} parent=0
    _
  %s6 = ssub.s32 1, %s4
  %s7 = scalar_select 0, %s6, %s4
  $region1: #{tpu_custom_call.1} parent=0
    #allocation2 [shape = 'u8[1024]{0}', space=vmem, size = 0x400, scoped, tag = 'input window, operand 0, single buffered']
    #allocation3 [shape = 's32[1]{0}', space=sflag, size = 0x4, scoped, tag = 'scoped memory for tpu_custom_call.1']
    #allocation4 [shape = 's32[1]{0}', space=sflag, size = 0x4, scoped, tag = 'scoped memory for tpu_custom_call.1']
    #allocation5 [shape = 'u8[1024]{0}', space=vmem, size = 0x400, scoped, tag = 'output window, operand 0, single buffered']
    %8 = vsyncpa [#allocation3], 0
    %9 = vsyncpa [#allocation4], 0
    // Predicated region
    $region2: #{tpu_custom_call.1} parent=1 // pred_check
      _
    $region3: #{tpu_custom_call.1} parent=1 // pred_check_branch
      %11 = sbr.rel (0) target = $region5
    $region4: #{tpu_custom_call.1} parent=1 // pred_region
      %s12 = sadd.s32 0, 0
      %p13 = scmp.lt.s32.totalorder %s12, 0
      %s14 = scalar_select %p13, %s12, 0
      %s16 = ssub.s32 32, 32
      %17 = vsyncadd [#allocation3], %s16
      %s18 = smul.addr %s14, 32
      %s19 = scalar_lea.hbm %s0, %s18
      %s21 = sshll.u32 [#allocation2], 4
      %s22 = int_to_ptr.vmem [resolvable:$true] %s21
      %24 = dma.hbm_to_vmem [thread:$0]  %s19, 32, %s22, [#allocation3]
    $region5: #{tpu_custom_call.1} parent=1 // pred_fallthru
      _
    // Predicated region
    $region6: #{tpu_custom_call.1} parent=1 // pred_check
      _
    $region7: #{tpu_custom_call.1} parent=1 // pred_check_branch
      %26 = sbr.rel (0) target = $region9
    $region8: #{tpu_custom_call.1} parent=1 // pred_region
      %s27 = sadd.s32 0, 0
      %p28 = scmp.lt.s32.totalorder %s27, 0
      %s29 = scalar_select %p28, %s27, 0
      %p30 = scmp.lt.s32.totalorder %s29, 0
      %s31 = scalar_select %p30, %s29, 0
      %s32 = smul.addr %s31, 2
      %s33 = scalar_lea.vmem %s1, %s32
      %s34 = sadd.s32 0, 0
      %p35 = scmp.lt.s32.totalorder %s34, 0
      %s36 = scalar_select %p35, %s34, 0
    $region9: #{tpu_custom_call.1} parent=1 // pred_fallthru
      _
    // Predicated region
    $region10: #{tpu_custom_call.1} parent=1 // pred_check
      _
    $region11: #{tpu_custom_call.1} parent=1 // pred_check_branch
      %38 = sbr.rel (0) target = $region13
    $region12: #{tpu_custom_call.1} parent=1 // pred_region
      %s39 = sadd.s32 0, 0
      %p40 = scmp.lt.s32.totalorder %s39, 0
      %s41 = scalar_select %p40, %s39, 0
      %p42 = scmp.lt.s32.totalorder %s41, 0
      %s43 = scalar_select %p42, %s41, 0
      %s44 = smul.addr %s43, 2
      %s45 = scalar_lea.vmem %s2, %s44
      %s46 = sadd.s32 0, 0
      %p47 = scmp.lt.s32.totalorder %s46, 0
      %s48 = scalar_select %p47, %s46, 0
    $region13: #{tpu_custom_call.1} parent=1 // pred_fallthru
      _
    // Predicated region
    $region14: #{tpu_custom_call.1} parent=1 // pred_check
      _
    $region15: #{tpu_custom_call.1} parent=1 // pred_check_branch
      %50 = sbr.rel (0) target = $region17
    $region16: #{tpu_custom_call.1} parent=1 // pred_region
      %51 = dma.done [#allocation3], 32
    $region17: #{tpu_custom_call.1} parent=1 // pred_fallthru
      _
    %s52 = sadd.s32 0, 0
    %p53 = scmp.lt.s32.totalorder %s52, 0
    %s54 = scalar_select %p53, %s52, 0
    %p55 = scmp.lt.s32.totalorder %s54, 0
    %s56 = scalar_select %p55, %s54, 0
    %s57 = smul.addr %s56, 2
    %s58 = scalar_lea.vmem %s1, %s57
    %s59 = sadd.s32 0, 0
    %p60 = scmp.lt.s32.totalorder %s59, 0
    %s61 = scalar_select %p60, %s59, 0
    %p62 = scmp.lt.s32.totalorder %s61, 0
    %s63 = scalar_select %p62, %s61, 0
    %s64 = smul.addr %s63, 2
    %s65 = scalar_lea.vmem %s2, %s64
    %s66 = sadd.s32 0, 0
    %p67 = scmp.lt.s32.totalorder %s66, 0
    %s68 = scalar_select %p67, %s66, 0
    %s69 = sadd.s32 0, 0
    %p70 = scmp.lt.s32.totalorder %s69, 0
    %s71 = scalar_select %p70, %s69, 0
    %p72 = scmp.lt.s32.totalorder %s71, 0
    %s73 = scalar_select %p72, %s71, 0
    %s74 = smul.addr %s73, 2
    %s75 = scalar_lea.vmem %s1, %s74
    %s76 = sadd.s32 0, 0
    %p77 = scmp.lt.s32.totalorder %s76, 0
    %s78 = scalar_select %p77, %s76, 0
    %s79 = sadd.s32 0, 0
    %p80 = scmp.lt.s32.totalorder %s79, 0
    %s81 = scalar_select %p80, %s79, 0
    %p82 = scmp.lt.s32.totalorder %s81, 0
    %s83 = scalar_select %p82, %s81, 0
    %s84 = smul.addr %s83, 2
    %s85 = scalar_lea.vmem %s2, %s84
    %s86 = sadd.s32 0, 0
    %p87 = scmp.lt.s32.totalorder %s86, 0
    %s88 = scalar_select %p87, %s86, 0
    %p89 = scmp.eq.s32.totalorder 0, 0
    // Predicated region
    $region18: #{tpu_custom_call.1} parent=1 // pred_check
      %p90 = pneg %p89
    $region19: #{tpu_custom_call.1} parent=1 // pred_check_branch
      %92 = sbr.rel (%p90) target = $region21
    $region20: #{tpu_custom_call.1} parent=1 // pred_region
      %vm93 = vcmask 254976
      %94 = vst.msk [vmem:[#allocation5] sm:$0x3] %vm93, 0.0
    $region21: #{tpu_custom_call.1} parent=1 // pred_fallthru
      _
    %v95 = vld [vmem:[#allocation2] sm:$0x3]
    %v96 = vld [vmem:[%s75] sm:$0x3]
    %v97 = vld [vmem:[%s85] sm:$0x3]
    %v98 = vmul.f32 %v95, %v95
    %v99 = vmul.f32 %v97, %v97
    %v100 = vadd.f32 %v98, %v99
    %v101 = vmul.f32 %v96, 2.0
    %v102 = vsub.f32 %v100, %v101
    %v103 = vld [vmem:[#allocation5] sm:$0x3]
    %v104 = vadd.f32 %v103, %v102
    %vm105 = vcmask 254976
    %106 = vst.msk [vmem:[#allocation5] sm:$0x3] %vm105, %v104
    // Predicated region
    $region22: #{tpu_custom_call.1} parent=1 // pred_check
      _
    $region23: #{tpu_custom_call.1} parent=1 // pred_check_branch
      %108 = sbr.rel (0) target = $region25
    $region24: #{tpu_custom_call.1} parent=1 // pred_region
      %s110 = ssub.s32 32, 32
      %111 = vsyncadd [#allocation4], %s110
      %s113 = sshll.u32 [#allocation5], 4
      %s114 = int_to_ptr.vmem [resolvable:$true] %s113
      %116 = dma.vmem_to_hbm [thread:$0]  %s114, 32, %s3, [#allocation4]
    $region25: #{tpu_custom_call.1} parent=1 // pred_fallthru
      _
    // Predicated region
    $region26: #{tpu_custom_call.1} parent=1 // pred_check
      _
    $region27: #{tpu_custom_call.1} parent=1 // pred_check_branch
      %118 = sbr.rel (0) target = $region29
    $region28: #{tpu_custom_call.1} parent=1 // pred_region
      %119 = dma.done [#allocation4], 32
    $region29: #{tpu_custom_call.1} parent=1 // pred_fallthru
      _
    %120 = vsyncpa [#allocation3], 1
    %121 = vsyncpa [#allocation4], 1

</llo_original>
